<compile_context>
chip_gen: v7x
topology: tpu7x:2x2x1
jax: 0.10.0
libtpu: 0.0.40
codegen_flags: <defaults>
</compile_context>

<pallas_src>
import functools

import jax
import jax.numpy as jnp
from jax.experimental import pallas as pl
from jax.experimental.pallas import tpu as pltpu

EPS = 1e-5


def base_block_kernel(x_ref, w_ref, b_ref, gamma_ref, beta_ref, o_ref, acc_ref):
    k = pl.program_id(1)

    # ---- init accumulator on first K step ----
    @pl.when(k == 0)
    def _():
        acc_ref[...] = jnp.zeros_like(acc_ref)

    # ---- K loop body: pure MXU work, bf16 x bf16 -> f32 accumulate ----
    acc_ref[...] += jnp.dot(
        x_ref[...], w_ref[...], preferred_element_type=jnp.float32
    )

    # ---- epilogue on last K step: bias + ReLU + BatchNorm (f32) ----
    @pl.when(k == pl.num_programs(1) - 1)
    def _():
        a = jnp.maximum(acc_ref[...] + b_ref[...], 0.0)          # Linear bias + ReLU
        n = a.shape[0]
        inv_n = jnp.float32(1.0 / n)
        # single pass over `a` for both moments
        s1 = jnp.sum(a, axis=0, keepdims=True)
        s2 = jnp.sum(a * a, axis=0, keepdims=True)
        mean = s1 * inv_n
        var = jnp.maximum(s2 * inv_n - mean * mean, 0.0)          # biased variance
        xhat = (a - mean) * jax.lax.rsqrt(var + EPS)
        o_ref[...] = (gamma_ref[...] * xhat + beta_ref[...]).astype(o_ref.dtype)


@functools.partial(jax.jit, static_argnames=("tn", "tk"))
def base_block_forward(x, w, b, gamma, beta, *, tn=128, tk=128):
    """x: (N, D_in) f32; w: (D_in, D_out) f32 (pre-transposed vs. torch Linear.weight);
    b/gamma/beta: (1, D_out) f32 row vectors. Returns (N, D_out) f32."""
    N, D_in = x.shape
    D_out = w.shape[1]

    # Pad feature dims to tile multiples (zeros are inert; padded outputs sliced off).
    d_in_p = pl.cdiv(D_in, tk) * tk
    d_out_p = pl.cdiv(D_out, tn) * tn
    if d_in_p != D_in:
        x = jnp.pad(x, ((0, 0), (0, d_in_p - D_in)))
        w = jnp.pad(w, ((0, d_in_p - D_in), (0, 0)))
    if d_out_p != D_out:
        w = jnp.pad(w, ((0, 0), (0, d_out_p - D_out)))
        b = jnp.pad(b, ((0, 0), (0, d_out_p - D_out)))
        gamma = jnp.pad(gamma, ((0, 0), (0, d_out_p - D_out)))
        beta = jnp.pad(beta, ((0, 0), (0, d_out_p - D_out)))

    # bf16 MXU inputs, f32 accumulation in-kernel.
    x_c = x.astype(jnp.bfloat16)
    w_c = w.astype(jnp.bfloat16)

    grid = (d_out_p // tn, d_in_p // tk)   # (feature tiles, K tiles) — K last

    out = pl.pallas_call(
        base_block_kernel,
        out_shape=jax.ShapeDtypeStruct((N, d_out_p), jnp.float32),
        grid_spec=pltpu.PrefetchScalarGridSpec(
            num_scalar_prefetch=0,
            grid=grid,
            in_specs=[
                pl.BlockSpec((N, tk), lambda j, k: (0, k)),        # x
                pl.BlockSpec((tk, tn), lambda j, k: (k, j)),       # w
                pl.BlockSpec((1, tn), lambda j, k: (0, j)),        # bias
                pl.BlockSpec((1, tn), lambda j, k: (0, j)),        # gamma
                pl.BlockSpec((1, tn), lambda j, k: (0, j)),        # beta
            ],
            out_specs=pl.BlockSpec((N, tn), lambda j, k: (0, j)),
            scratch_shapes=[pltpu.VMEM((N, tn), jnp.float32)],     # f32 accumulator
        ),
        compiler_params=pltpu.CompilerParams(
            dimension_semantics=("parallel", "arbitrary"),
            vmem_limit_bytes=32 * 1024 * 1024,
        ),
    )(x_c, w_c, b, gamma, beta)

    return out[:, :D_out] if d_out_p != D_out else out


def reference_forward(x, w, b, gamma, beta):
    """Pure-JAX reference with the same bf16-input / f32-accum matmul precision."""
    y = jnp.dot(
        x.astype(jnp.bfloat16), w.astype(jnp.bfloat16),
        preferred_element_type=jnp.float32,
    ) + b
    a = jnp.maximum(y, 0.0)
    mean = jnp.mean(a, axis=0, keepdims=True)
    var = jnp.mean((a - mean) ** 2, axis=0, keepdims=True)   # biased (BN training mode)
    xhat = (a - mean) / jnp.sqrt(var + EPS)
    return gamma * xhat + beta


def _make_params(key, d_in, d_out):
    kw, kb, kg, kbe = jax.random.split(key, 4)
    bound = 1.0 / jnp.sqrt(jnp.float32(d_in))                 # nn.Linear default init
    w = jax.random.uniform(kw, (d_in, d_out), jnp.float32, -bound, bound)
    b = jax.random.uniform(kb, (1, d_out), jnp.float32, -bound, bound)
    # BN init is gamma=1, beta=0; use perturbed values to exercise the affine path.
    gamma = 1.0 + 0.1 * jax.random.normal(kg, (1, d_out), jnp.float32)
    beta = 0.1 * jax.random.normal(kbe, (1, d_out), jnp.float32)
    return w, b, gamma, beta


if __name__ == "__main__":
    key = jax.random.PRNGKey(0)

    # Case 1: lane-dense, multi-tile shapes (grid = (2, 2)).
    N, D_in, D_out = 64, 256, 256
    k1, k2, key = jax.random.split(key, 3)
    x = jax.random.normal(k1, (N, D_in), dtype=jnp.float32)
    w, b, gamma, beta = _make_params(k2, D_in, D_out)

    out = jax.block_until_ready(base_block_forward(x, w, b, gamma, beta))
    ref = reference_forward(x, w, b, gamma, beta)
    assert out.shape == (N, D_out)
    assert jnp.allclose(out, ref, atol=1e-3, rtol=1e-3)

    # Case 2: tiny module-default-like shapes (exercises the padding path).
    N2, D_in2, D_out2 = 8, 32, 16
    k3, k4 = jax.random.split(key)
    x2 = jax.random.normal(k3, (N2, D_in2), dtype=jnp.float32)
    w2, b2, g2, be2 = _make_params(k4, D_in2, D_out2)

    out2 = jax.block_until_ready(base_block_forward(x2, w2, b2, g2, be2))
    ref2 = reference_forward(x2, w2, b2, g2, be2)
    assert out2.shape == (N2, D_out2)
    assert jnp.allclose(out2, ref2, atol=1e-3, rtol=1e-3)

    print("KERNEL_OK")
</pallas_src>

<mosaic_0001>
module attributes {stable_mosaic.version = 11 : i64} {
  func.func @base_block_kernel(%arg0: i32, %arg1: i32, %arg2: memref<64x128xbf16, #tpu.memory_space<vmem>>, %arg3: memref<128x128xbf16, #tpu.memory_space<vmem>>, %arg4: memref<1x128xf32, #tpu.memory_space<vmem>>, %arg5: memref<1x128xf32, #tpu.memory_space<vmem>>, %arg6: memref<1x128xf32, #tpu.memory_space<vmem>>, %arg7: memref<64x128xf32, #tpu.memory_space<vmem>>, %arg8: memref<64x128xf32, #tpu.memory_space<vmem>>) attributes {dimension_semantics = [#tpu.dimension_semantics<parallel>, #tpu.dimension_semantics<arbitrary>], iteration_bounds = array<i64: 2, 2>, scalar_prefetch = 0 : i64, scratch_operands = 1 : i64, tpu.core_type = #tpu.core_type<tc>, window_params = [{transform_indices = @transform_0, window_bounds = array<i64: 64, 128>}, {transform_indices = @transform_1, window_bounds = array<i64: 128, 128>}, {transform_indices = @transform_2, window_bounds = array<i64: 1, 128>}, {transform_indices = @transform_3, window_bounds = array<i64: 1, 128>}, {transform_indices = @transform_4, window_bounds = array<i64: 1, 128>}, {transform_indices = @transform_5, window_bounds = array<i64: 64, 128>}]} {
    %c0_i32 = arith.constant 0 : i32
    %0 = arith.cmpi eq, %arg1, %c0_i32 : i32
    %1 = arith.extui %0 : i1 to i32
    %c0_i32_0 = arith.constant 0 : i32
    %2 = arith.cmpi ne, %1, %c0_i32_0 : i32
    scf.if %2 {
      %cst_9 = arith.constant 0.000000e+00 : f32
      %12 = vector.broadcast %cst_9 : f32 to vector<64x128xf32>
      %c0_10 = arith.constant 0 : index
      %c0_11 = arith.constant 0 : index
      %13 = vector.load %arg8[%c0_10, %c0_11] : memref<64x128xf32, #tpu.memory_space<vmem>>, vector<64x128xf32>
      tpu.vector_store %arg8[%c0_10, %c0_11], %12 {strides = array<i32>} : memref<64x128xf32, #tpu.memory_space<vmem>>, vector<64x128xf32>,
    } else {
    }
    %c0 = arith.constant 0 : index
    %c0_1 = arith.constant 0 : index
    %3 = vector.load %arg8[%c0, %c0_1] : memref<64x128xf32, #tpu.memory_space<vmem>>, vector<64x128xf32>
    %c0_2 = arith.constant 0 : index
    %c0_3 = arith.constant 0 : index
    %4 = vector.load %arg2[%c0_2, %c0_3] : memref<64x128xbf16, #tpu.memory_space<vmem>>, vector<64x128xbf16>
    %c0_4 = arith.constant 0 : index
    %c0_5 = arith.constant 0 : index
    %5 = vector.load %arg3[%c0_4, %c0_5] : memref<128x128xbf16, #tpu.memory_space<vmem>>, vector<128x128xbf16>
    %cst = arith.constant dense<0.000000e+00> : vector<64x128xf32>
    %6 = tpu.matmul %4, %5, %cst {dimension_numbers = #tpu.dot_dimension_numbers<[1], [0], [0], [1], [0, 0, 1, 1], [], []>} : vector<64x128xbf16>, vector<128x128xbf16>, vector<64x128xf32> -> vector<64x128xf32>
    %7 = arith.addf %3, %6 : vector<64x128xf32>
    %c0_6 = arith.constant 0 : index
    %c0_7 = arith.constant 0 : index
    %8 = vector.load %arg8[%c0_6, %c0_7] : memref<64x128xf32, #tpu.memory_space<vmem>>, vector<64x128xf32>
    tpu.vector_store %arg8[%c0_6, %c0_7], %7 {strides = array<i32>} : memref<64x128xf32, #tpu.memory_space<vmem>>, vector<64x128xf32>,
    %c1_i32 = arith.constant 1 : i32
    %9 = arith.cmpi eq, %arg1, %c1_i32 : i32
    %10 = arith.extui %9 : i1 to i32
    %c0_i32_8 = arith.constant 0 : i32
    %11 = arith.cmpi ne, %10, %c0_i32_8 : i32
    scf.if %11 {
      %c0_9 = arith.constant 0 : index
      %c0_10 = arith.constant 0 : index
      %12 = vector.load %arg8[%c0_9, %c0_10] : memref<64x128xf32, #tpu.memory_space<vmem>>, vector<64x128xf32>
      %c0_11 = arith.constant 0 : index
      %c0_12 = arith.constant 0 : index
      %13 = vector.load %arg4[%c0_11, %c0_12] : memref<1x128xf32, #tpu.memory_space<vmem>>, vector<1x128xf32>
      %14 = vector.broadcast %13 : vector<1x128xf32> to vector<64x128xf32>
      %15 = arith.addf %12, %14 : vector<64x128xf32>
      %cst_13 = arith.constant 0.000000e+00 : f32
      %16 = vector.broadcast %cst_13 : f32 to vector<64x128xf32>
      %17 = arith.maximumf %15, %16 : vector<64x128xf32>
      %cst_14 = arith.constant dense<0.000000e+00> : vector<128xf32>
      %18 = vector.multi_reduction <add>, %17, %cst_14 [0] : vector<64x128xf32> to vector<128xf32>
      %19 = vector.shape_cast %18 : vector<128xf32> to vector<1x128xf32>
      %20 = arith.mulf %17, %17 : vector<64x128xf32>
      %cst_15 = arith.constant dense<0.000000e+00> : vector<128xf32>
      %21 = vector.multi_reduction <add>, %20, %cst_15 [0] : vector<64x128xf32> to vector<128xf32>
      %22 = vector.shape_cast %21 : vector<128xf32> to vector<1x128xf32>
      %cst_16 = arith.constant 1.562500e-02 : f32
      %23 = vector.broadcast %cst_16 : f32 to vector<1x128xf32>
      %24 = arith.mulf %19, %23 : vector<1x128xf32>
      %cst_17 = arith.constant 1.562500e-02 : f32
      %25 = vector.broadcast %cst_17 : f32 to vector<1x128xf32>
      %26 = arith.mulf %22, %25 : vector<1x128xf32>
      %27 = arith.mulf %24, %24 : vector<1x128xf32>
      %28 = arith.subf %26, %27 : vector<1x128xf32>
      %cst_18 = arith.constant 0.000000e+00 : f32
      %29 = vector.broadcast %cst_18 : f32 to vector<1x128xf32>
      %30 = arith.maximumf %28, %29 : vector<1x128xf32>
      %31 = vector.broadcast %24 : vector<1x128xf32> to vector<64x128xf32>
      %32 = arith.subf %17, %31 : vector<64x128xf32>
      %cst_19 = arith.constant 9.99999974E-6 : f32
      %33 = vector.broadcast %cst_19 : f32 to vector<1x128xf32>
      %34 = arith.addf %30, %33 : vector<1x128xf32>
      %35 = math.rsqrt %34 : vector<1x128xf32>
      %36 = vector.broadcast %35 : vector<1x128xf32> to vector<64x128xf32>
      %37 = arith.mulf %32, %36 : vector<64x128xf32>
      %c0_20 = arith.constant 0 : index
      %c0_21 = arith.constant 0 : index
      %38 = vector.load %arg5[%c0_20, %c0_21] : memref<1x128xf32, #tpu.memory_space<vmem>>, vector<1x128xf32>
      %39 = vector.broadcast %38 : vector<1x128xf32> to vector<64x128xf32>
      %40 = arith.mulf %39, %37 : vector<64x128xf32>
      %c0_22 = arith.constant 0 : index
      %c0_23 = arith.constant 0 : index
      %41 = vector.load %arg6[%c0_22, %c0_23] : memref<1x128xf32, #tpu.memory_space<vmem>>, vector<1x128xf32>
      %42 = vector.broadcast %41 : vector<1x128xf32> to vector<64x128xf32>
      %43 = arith.addf %40, %42 : vector<64x128xf32>
      %c0_24 = arith.constant 0 : index
      %c0_25 = arith.constant 0 : index
      %44 = vector.load %arg7[%c0_24, %c0_25] : memref<64x128xf32, #tpu.memory_space<vmem>>, vector<64x128xf32>
      tpu.vector_store %arg7[%c0_24, %c0_25], %43 {strides = array<i32>} : memref<64x128xf32, #tpu.memory_space<vmem>>, vector<64x128xf32>,
    } else {
    }
    return
  }
  func.func @transform_0(%arg0: i32, %arg1: i32) -> (i32, i32) {
    %c0_i32 = arith.constant 0 : i32
    %c0_i32_0 = arith.constant 0 : i32
    return %c0_i32, %arg1 : i32, i32
  }
  func.func @transform_1(%arg0: i32, %arg1: i32) -> (i32, i32) {
    %c0_i32 = arith.constant 0 : i32
    return %arg1, %arg0 : i32, i32
  }
  func.func @transform_2(%arg0: i32, %arg1: i32) -> (i32, i32) {
    %c0_i32 = arith.constant 0 : i32
    %c0_i32_0 = arith.constant 0 : i32
    return %c0_i32, %arg0 : i32, i32
  }
  func.func @transform_3(%arg0: i32, %arg1: i32) -> (i32, i32) {
    %c0_i32 = arith.constant 0 : i32
    %c0_i32_0 = arith.constant 0 : i32
    return %c0_i32, %arg0 : i32, i32
  }
  func.func @transform_4(%arg0: i32, %arg1: i32) -> (i32, i32) {
    %c0_i32 = arith.constant 0 : i32
    %c0_i32_0 = arith.constant 0 : i32
    return %c0_i32, %arg0 : i32, i32
  }
  func.func @transform_5(%arg0: i32, %arg1: i32) -> (i32, i32) {
    %c0_i32 = arith.constant 0 : i32
    %c0_i32_0 = arith.constant 0 : i32
    return %c0_i32, %arg0 : i32, i32
  }
}

</mosaic_0001>

<llo_original>
// kernel: base_block_forward.1
$region0: #{base_block_forward.1}
  #allocation0 [shape = 'u32[]', space=smem, size = 0x4, offset = 0x4, fixed_abs, tag = 'smem constant byte address 0x4 - core index']
  #allocation1 [shape = 'u32[144,128]{1,0:T(1,128)}', space=vmem, size = 0x12000, scoped, tag = 'internal scratch']
  #allocation2 [shape = 'f32[64,128]{1,0:T(8,128)}', space=vmem, size = 0x8000, scoped, tag = 'scratch operand']
  %s0 = inlined_call_operand.vmem [shape: bf16[64,256], index: 0, kind: input, shape index: {}]
  %s1 = inlined_call_operand.vmem [shape: bf16[256,256], index: 1, kind: input, shape index: {}]
  %s2 = inlined_call_operand.vmem [shape: f32[1,256], index: 2, kind: input, shape index: {}]
  %s3 = inlined_call_operand.vmem [shape: f32[1,256], index: 3, kind: input, shape index: {}]
  %s4 = inlined_call_operand.vmem [shape: f32[1,256], index: 4, kind: input, shape index: {}]
  %s5 = inlined_call_operand.hbm [shape: f32[64,256], index: 5, kind: output, shape index: {}]
  %s6 = sld [smem:[#allocation0]]
  $region143: #{base_block_forward.1} parent=0
    _
  %s8 = ssub.s32 1, %s6
  %s9 = scalar_select 0, %s8, %s6
  $region1: #{base_block_forward.1} parent=0
    #allocation3 [shape = 'u8[32768]{0}', space=vmem, size = 0x8000, scoped, tag = 'input window, operand 0']
    #allocation4 [shape = 'u8[65536]{0}', space=vmem, size = 0x10000, scoped, tag = 'input window, operand 1']
    #allocation5 [shape = 'u8[65536]{0}', space=vmem, size = 0x10000, scoped, tag = 'output window, operand 0']
    #allocation6 [shape = 's32[2]{0}', space=sflag, size = 0x8, scoped, tag = 'scoped memory for base_block_forward.1']
    %10 = vsyncpa [#allocation6], 0
    %s11 = scalar_lea.sflag [#allocation6], 1
    %12 = vsyncpa %s11, 0
    loop: start=0, step=1, limit=6
    $region2: #{base_block_forward.1} parent=1 // loop_pre_header
      _
    $region3: #{base_block_forward.1} parent=1 // loop_header
      %s14 = sphi 0, %s18
      %p15 = scmp.ge.s32.totalorder %s14, 6
      %s21 = sphi 0, %s33
      %s22 = sphi 0, %s29
      %s23 = sphi 0, %s21
      %s24 = sphi 0, %s22
      %s25 = sphi 0, %s23
      %s26 = sphi 0, %s24
      %s36 = sphi 0, %s38
      %s39 = sphi 0, %s36
      %s40 = sphi 0, %s39
      %s56 = sphi 0, %s40
      %s64 = sphi 0, %s66
      %s67 = sphi 0, %s64
      %s68 = sphi 0, %s67
      %s84 = sphi 0, %s68
      %s90 = sphi 0, %s92
      %s93 = sphi 0, %s90
      %s94 = sphi 0, %s93
      %s110 = sphi 0, %s94
      %s116 = sphi 0, %s118
      %s119 = sphi 0, %s116
      %s120 = sphi 0, %s119
      %s136 = sphi 0, %s120
      %s142 = sphi 0, %s144
      %s145 = sphi 0, %s142
      %s146 = sphi 0, %s145
      %s162 = sphi 0, %s146
      %s168 = sphi 0, %s170
      %s171 = sphi 0, %s168
      %s172 = sphi 0, %s171
      %s188 = sphi 0, %s172
    $region4: #{base_block_forward.1} parent=1 // loop_header_branch
      %17 = sbr.rel (%p15) target = $region8
    $region5: #{base_block_forward.1} parent=1 // loop_body
      %s19 = ssub.s32 %s14, 1
      %s20 = ssub.s32 %s14, 2
      %s27 = sadd.s32 1, %s22
      %p28 = scmp.ge.s32.totalorder %s27, 2
      %s29 = scalar_select %p28, 0, %s27
      %s30 = sadd.s32 1, %s21
      %s31 = scalar_select %p28, %s30, %s21
      %p32 = scmp.ge.s32.totalorder %s31, 2
      %s33 = scalar_select %p32, 0, %s31
      %s34 = ssub.s32 %s22, %s29
      %p35 = scmp.eq.s32.totalorder %s34, 0
      %s37 = sadd.s32 %s36, 1
      %s38 = scalar_select %p35, %s36, %s37
      %p41 = pneg %p35
      %p42 = scmp.eq.s32.totalorder %s14, 3
      %p43 = por %p41, %p42
      %p44 = scmp.ne.s32.totalorder %s36, %s39
      %p45 = scmp.eq.s32.totalorder %s14, 0
      %p46 = por %p44, %p45
      %p47 = scmp.ne.s32.totalorder %s36, %s39
      %p48 = scmp.eq.s32.totalorder %s19, 3
      %p49 = por %p47, %p48
      %p50 = scmp.ne.s32.totalorder %s39, %s40
      %p51 = scmp.eq.s32.totalorder %s19, 0
      %p52 = por %p50, %p51
      %p53 = scmp.ne.s32.totalorder %s39, %s40
      %p54 = scmp.eq.s32.totalorder %s20, 3
      %p55 = por %p53, %p54
      %p57 = scmp.ne.s32.totalorder %s40, %s56
      %p58 = scmp.eq.s32.totalorder %s20, 0
      %p59 = por %p57, %p58
      %s60 = ssub.s32 %s22, %s29
      %s61 = ssub.s32 %s21, %s33
      %s62 = sor.u32 %s60, %s61
      %p63 = scmp.eq.s32.totalorder %s62, 0
      %s65 = sadd.s32 %s64, 1
      %s66 = scalar_select %p63, %s64, %s65
      %p69 = pneg %p63
      %p70 = scmp.eq.s32.totalorder %s14, 3
      %p71 = por %p69, %p70
      %p72 = scmp.ne.s32.totalorder %s64, %s67
      %p73 = scmp.eq.s32.totalorder %s14, 0
      %p74 = por %p72, %p73
      %p75 = scmp.ne.s32.totalorder %s64, %s67
      %p76 = scmp.eq.s32.totalorder %s19, 3
      %p77 = por %p75, %p76
      %p78 = scmp.ne.s32.totalorder %s67, %s68
      %p79 = scmp.eq.s32.totalorder %s19, 0
      %p80 = por %p78, %p79
      %p81 = scmp.ne.s32.totalorder %s67, %s68
      %p82 = scmp.eq.s32.totalorder %s20, 3
      %p83 = por %p81, %p82
      %p85 = scmp.ne.s32.totalorder %s68, %s84
      %p86 = scmp.eq.s32.totalorder %s20, 0
      %p87 = por %p85, %p86
      %s88 = ssub.s32 %s21, %s33
      %p89 = scmp.eq.s32.totalorder %s88, 0
      %s91 = sadd.s32 %s90, 1
      %s92 = scalar_select %p89, %s90, %s91
      %p95 = pneg %p89
      %p96 = scmp.eq.s32.totalorder %s14, 3
      %p97 = por %p95, %p96
      %p98 = scmp.ne.s32.totalorder %s90, %s93
      %p99 = scmp.eq.s32.totalorder %s14, 0
      %p100 = por %p98, %p99
      %p101 = scmp.ne.s32.totalorder %s90, %s93
      %p102 = scmp.eq.s32.totalorder %s19, 3
      %p103 = por %p101, %p102
      %p104 = scmp.ne.s32.totalorder %s93, %s94
      %p105 = scmp.eq.s32.totalorder %s19, 0
      %p106 = por %p104, %p105
      %p107 = scmp.ne.s32.totalorder %s93, %s94
      %p108 = scmp.eq.s32.totalorder %s20, 3
      %p109 = por %p107, %p108
      %p111 = scmp.ne.s32.totalorder %s94, %s110
      %p112 = scmp.eq.s32.totalorder %s20, 0
      %p113 = por %p111, %p112
      %s114 = ssub.s32 %s21, %s33
      %p115 = scmp.eq.s32.totalorder %s114, 0
      %s117 = sadd.s32 %s116, 1
      %s118 = scalar_select %p115, %s116, %s117
      %p121 = pneg %p115
      %p122 = scmp.eq.s32.totalorder %s14, 3
      %p123 = por %p121, %p122
      %p124 = scmp.ne.s32.totalorder %s116, %s119
      %p125 = scmp.eq.s32.totalorder %s14, 0
      %p126 = por %p124, %p125
      %p127 = scmp.ne.s32.totalorder %s116, %s119
      %p128 = scmp.eq.s32.totalorder %s19, 3
      %p129 = por %p127, %p128
      %p130 = scmp.ne.s32.totalorder %s119, %s120
      %p131 = scmp.eq.s32.totalorder %s19, 0
      %p132 = por %p130, %p131
      %p133 = scmp.ne.s32.totalorder %s119, %s120
      %p134 = scmp.eq.s32.totalorder %s20, 3
      %p135 = por %p133, %p134
      %p137 = scmp.ne.s32.totalorder %s120, %s136
      %p138 = scmp.eq.s32.totalorder %s20, 0
      %p139 = por %p137, %p138
      %s140 = ssub.s32 %s21, %s33
      %p141 = scmp.eq.s32.totalorder %s140, 0
      %s143 = sadd.s32 %s142, 1
      %s144 = scalar_select %p141, %s142, %s143
      %p147 = pneg %p141
      %p148 = scmp.eq.s32.totalorder %s14, 3
      %p149 = por %p147, %p148
      %p150 = scmp.ne.s32.totalorder %s142, %s145
      %p151 = scmp.eq.s32.totalorder %s14, 0
      %p152 = por %p150, %p151
      %p153 = scmp.ne.s32.totalorder %s142, %s145
      %p154 = scmp.eq.s32.totalorder %s19, 3
      %p155 = por %p153, %p154
      %p156 = scmp.ne.s32.totalorder %s145, %s146
      %p157 = scmp.eq.s32.totalorder %s19, 0
      %p158 = por %p156, %p157
      %p159 = scmp.ne.s32.totalorder %s145, %s146
      %p160 = scmp.eq.s32.totalorder %s20, 3
      %p161 = por %p159, %p160
      %p163 = scmp.ne.s32.totalorder %s146, %s162
      %p164 = scmp.eq.s32.totalorder %s20, 0
      %p165 = por %p163, %p164
      %s166 = ssub.s32 %s21, %s33
      %p167 = scmp.eq.s32.totalorder %s166, 0
      %s169 = sadd.s32 %s168, 1
      %s170 = scalar_select %p167, %s168, %s169
      %p173 = pneg %p167
      %p174 = scmp.eq.s32.totalorder %s14, 3
      %p175 = por %p173, %p174
      %p176 = scmp.ne.s32.totalorder %s168, %s171
      %p177 = scmp.eq.s32.totalorder %s14, 0
      %p178 = por %p176, %p177
      %p179 = scmp.ne.s32.totalorder %s168, %s171
      %p180 = scmp.eq.s32.totalorder %s19, 3
      %p181 = por %p179, %p180
      %p182 = scmp.ne.s32.totalorder %s171, %s172
      %p183 = scmp.eq.s32.totalorder %s19, 0
      %p184 = por %p182, %p183
      %p185 = scmp.ne.s32.totalorder %s171, %s172
      %p186 = scmp.eq.s32.totalorder %s20, 3
      %p187 = por %p185, %p186
      %p189 = scmp.ne.s32.totalorder %s172, %s188
      %p190 = scmp.eq.s32.totalorder %s20, 0
      %p191 = por %p189, %p190
      %p192 = scmp.le.s32.totalorder 1, %s14
      %p193 = scmp.lt.s32.totalorder %s14, 5
      %p194 = pnand %p192, %p193
      %p195 = pneg %p194
      // Predicated region
      $region9: #{base_block_forward.1} parent=5 // pred_check
        _
      $region10: #{base_block_forward.1} parent=5 // pred_check_branch
        %197 = sbr.rel (%p194) target = $region12
      $region11: #{base_block_forward.1} parent=5 // pred_region
        %s198 = ssub.s32 %s14, 1
      $region12: #{base_block_forward.1} parent=5 // pred_fallthru
        _
      %p199 = scmp.lt.s32.totalorder %s14, 4
      // Predicated region
      $region13: #{base_block_forward.1} parent=5 // pred_check
        %p200 = pneg %p199
      $region14: #{base_block_forward.1} parent=5 // pred_check_branch
        %202 = sbr.rel (%p200) target = $region16
      $region15: #{base_block_forward.1} parent=5 // pred_region
        // Predicated region
        $region17: #{base_block_forward.1} parent=15 // pred_check
          %p203 = pneg %p46
        $region18: #{base_block_forward.1} parent=15 // pred_check_branch
          %205 = sbr.rel (%p203) target = $region20
        $region19: #{base_block_forward.1} parent=15 // pred_region
          %s206 = sand.u32 %s36, 1
          %s207 = sand.u32 %s36, 1
          %s208 = smul.addr %s207, 32
          %s209 = scalar_lea.vmem [#allocation3], %s208
          %s210 = smul.addr %s22, 4
          %s211 = scalar_lea.vmem %s0, %s210
          // Predicated region
          $region21: #{base_block_forward.1} parent=19 // pred_check
            _
          $region22: #{base_block_forward.1} parent=19 // pred_check_branch
            %213 = sbr.rel (0) target = $region24
          $region23: #{base_block_forward.1} parent=19 // pred_region
            // Predicated region
            $region25: #{base_block_forward.1} parent=23 // pred_check
              _
            $region26: #{base_block_forward.1} parent=23 // pred_check_branch
              %215 = sbr.rel target = $region28
            $region27: #{base_block_forward.1} parent=23 // pred_region
              // Predicated region
              $region40: #{base_block_forward.1} parent=27 // pred_check
                _
              $region41: #{base_block_forward.1} parent=27 // pred_check_branch
                %244 = sbr.rel (0) target = $region43
              $region42: #{base_block_forward.1} parent=27 // pred_region
                loop: start=0, step=1, limit=1
                $region44: #{base_block_forward.1} parent=42 // loop_pre_header
                  _
                $region45: #{base_block_forward.1} parent=42 // loop_header
                  %s246 = sphi 0, %s250
                  %p247 = scmp.ge.s32.totalorder %s246, 1
                  %s251 = sphi %s211, %s211
                  %s252 = sphi %s209, %s209
                $region46: #{base_block_forward.1} parent=42 // loop_header_branch
                  %249 = sbr.rel (%p247) target = $region50
                $region47: #{base_block_forward.1} parent=42 // loop_body
                  _
                $region48: #{base_block_forward.1} parent=42 // loop_footer
                  %s250 = sadd.s32 1, %s246
                $region49: #{base_block_forward.1} parent=42 // loop_footer_branch
                  %245 = sbr.rel target = $region45
                $region50: #{base_block_forward.1} parent=42 // loop_exit
                  _
                loop: start=0, step=1, limit=1
                $region51: #{base_block_forward.1} parent=42 // loop_pre_header
                  _
                $region52: #{base_block_forward.1} parent=42 // loop_header
                  %s255 = sphi 0, %s259
                  %p256 = scmp.ge.s32.totalorder %s255, 1
                  %s260 = sphi %s211, %s211
                  %s261 = sphi %s209, %s209
                $region53: #{base_block_forward.1} parent=42 // loop_header_branch
                  %258 = sbr.rel (%p256) target = $region57
                $region54: #{base_block_forward.1} parent=42 // loop_body
                  %v262 = vld [vmem:[%s260] sm:$0xf]
                  %263 = vst [vmem:[%s261] sm:$0xf] %v262
                  %v264 = vld [vmem:[%s260 + $0x8] sm:$0xf]
                  %265 = vst [vmem:[%s261 + $0x4] sm:$0xf] %v264
                  %v266 = vld [vmem:[%s260 + $0x10] sm:$0xf]
                  %267 = vst [vmem:[%s261 + $0x8] sm:$0xf] %v266
                  %v268 = vld [vmem:[%s260 + $0x18] sm:$0xf]
                  %269 = vst [vmem:[%s261 + $0xc] sm:$0xf] %v268
                  %v270 = vld [vmem:[%s260 + $0x20] sm:$0xf]
                  %271 = vst [vmem:[%s261 + $0x10] sm:$0xf] %v270
                  %v272 = vld [vmem:[%s260 + $0x28] sm:$0xf]
                  %273 = vst [vmem:[%s261 + $0x14] sm:$0xf] %v272
                  %v274 = vld [vmem:[%s260 + $0x30] sm:$0xf]
                  %275 = vst [vmem:[%s261 + $0x18] sm:$0xf] %v274
                  %v276 = vld [vmem:[%s260 + $0x38] sm:$0xf]
                  %277 = vst [vmem:[%s261 + $0x1c] sm:$0xf] %v276
                $region55: #{base_block_forward.1} parent=42 // loop_footer
                  %s259 = sadd.s32 1, %s255
                $region56: #{base_block_forward.1} parent=42 // loop_footer_branch
                  %254 = sbr.rel target = $region52
                $region57: #{base_block_forward.1} parent=42 // loop_exit
                  _
              $region43: #{base_block_forward.1} parent=27 // pred_fallthru
                _
            $region28: #{base_block_forward.1} parent=23 // pred_fallthru
              _
            // Predicated region
            $region29: #{base_block_forward.1} parent=23 // pred_check
              _
            $region30: #{base_block_forward.1} parent=23 // pred_check_branch
              %217 = sbr.rel (0) target = $region32
            $region31: #{base_block_forward.1} parent=23 // pred_region
              loop: start=0, step=1, limit=1
              $region33: #{base_block_forward.1} parent=31 // loop_pre_header
                _
              $region34: #{base_block_forward.1} parent=31 // loop_header
                %s220 = sphi 0, %s224
                %p221 = scmp.ge.s32.totalorder %s220, 1
                %s225 = sphi %s211, %s211
                %s226 = sphi %s209, %s209
              $region35: #{base_block_forward.1} parent=31 // loop_header_branch
                %223 = sbr.rel (%p221) target = $region39
              $region36: #{base_block_forward.1} parent=31 // loop_body
                %v227 = vld [vmem:[%s225] sm:$0xf]
                %228 = vst [vmem:[%s226] sm:$0xf] %v227
                %v229 = vld [vmem:[%s225 + $0x8] sm:$0xf]
                %230 = vst [vmem:[%s226 + $0x4] sm:$0xf] %v229
                %v231 = vld [vmem:[%s225 + $0x10] sm:$0xf]
                %232 = vst [vmem:[%s226 + $0x8] sm:$0xf] %v231
                %v233 = vld [vmem:[%s225 + $0x18] sm:$0xf]
                %234 = vst [vmem:[%s226 + $0xc] sm:$0xf] %v233
                %v235 = vld [vmem:[%s225 + $0x20] sm:$0xf]
                %236 = vst [vmem:[%s226 + $0x10] sm:$0xf] %v235
                %v237 = vld [vmem:[%s225 + $0x28] sm:$0xf]
                %238 = vst [vmem:[%s226 + $0x14] sm:$0xf] %v237
                %v239 = vld [vmem:[%s225 + $0x30] sm:$0xf]
                %240 = vst [vmem:[%s226 + $0x18] sm:$0xf] %v239
                %v241 = vld [vmem:[%s225 + $0x38] sm:$0xf]
                %242 = vst [vmem:[%s226 + $0x1c] sm:$0xf] %v241
              $region37: #{base_block_forward.1} parent=31 // loop_footer
                %s224 = sadd.s32 1, %s220
              $region38: #{base_block_forward.1} parent=31 // loop_footer_branch
                %219 = sbr.rel target = $region34
              $region39: #{base_block_forward.1} parent=31 // loop_exit
                _
            $region32: #{base_block_forward.1} parent=23 // pred_fallthru
              _
          $region24: #{base_block_forward.1} parent=19 // pred_fallthru
            _
          %278 = vnop
        $region20: #{base_block_forward.1} parent=15 // pred_fallthru
          _
        // Predicated region
        $region58: #{base_block_forward.1} parent=15 // pred_check
          %p279 = pneg %p74
        $region59: #{base_block_forward.1} parent=15 // pred_check_branch
          %281 = sbr.rel (%p279) target = $region61
        $region60: #{base_block_forward.1} parent=15 // pred_region
          %s282 = sand.u32 %s64, 1
          %s283 = sand.u32 %s64, 1
          %s284 = smul.addr %s283, 64
          %s285 = scalar_lea.vmem [#allocation4], %s284
          %s286 = smul.u32 16, %s22
          %s287 = smul.addr %s286, 2
          %s288 = sadd.s32 %s21, %s287
          %s289 = smul.addr %s288, 4
          %s290 = scalar_lea.vmem %s1, %s289
          // Predicated region
          $region62: #{base_block_forward.1} parent=60 // pred_check
            _
          $region63: #{base_block_forward.1} parent=60 // pred_check_branch
            %292 = sbr.rel (0) target = $region65
          $region64: #{base_block_forward.1} parent=60 // pred_region
            // Predicated region
            $region66: #{base_block_forward.1} parent=64 // pred_check
              _
            $region67: #{base_block_forward.1} parent=64 // pred_check_branch
              %294 = sbr.rel target = $region69
            $region68: #{base_block_forward.1} parent=64 // pred_region
              // Predicated region
              $region81: #{base_block_forward.1} parent=68 // pred_check
                _
              $region82: #{base_block_forward.1} parent=68 // pred_check_branch
                %339 = sbr.rel (0) target = $region84
              $region83: #{base_block_forward.1} parent=68 // pred_region
                loop: start=0, step=1, limit=1
                $region85: #{base_block_forward.1} parent=83 // loop_pre_header
                  _
                $region86: #{base_block_forward.1} parent=83 // loop_header
                  %s341 = sphi 0, %s345
                  %p342 = scmp.ge.s32.totalorder %s341, 1
                  %s346 = sphi %s290, %s290
                  %s347 = sphi %s285, %s285
                $region87: #{base_block_forward.1} parent=83 // loop_header_branch
                  %344 = sbr.rel (%p342) target = $region91
                $region88: #{base_block_forward.1} parent=83 // loop_body
                  _
                $region89: #{base_block_forward.1} parent=83 // loop_footer
                  %s345 = sadd.s32 1, %s341
                $region90: #{base_block_forward.1} parent=83 // loop_footer_branch
                  %340 = sbr.rel target = $region86
                $region91: #{base_block_forward.1} parent=83 // loop_exit
                  _
                loop: start=0, step=1, limit=1
                $region92: #{base_block_forward.1} parent=83 // loop_pre_header
                  _
                $region93: #{base_block_forward.1} parent=83 // loop_header
                  %s350 = sphi 0, %s354
                  %p351 = scmp.ge.s32.totalorder %s350, 1
                  %s355 = sphi %s290, %s290
                  %s356 = sphi %s285, %s285
                $region94: #{base_block_forward.1} parent=83 // loop_header_branch
                  %353 = sbr.rel (%p351) target = $region98
                $region95: #{base_block_forward.1} parent=83 // loop_body
                  %v357 = vld [vmem:[%s355] sm:$0xf]
                  %358 = vst [vmem:[%s356] sm:$0xf] %v357
                  %v359 = vld [vmem:[%s355 + $0x8] sm:$0xf]
                  %360 = vst [vmem:[%s356 + $0x4] sm:$0xf] %v359
                  %v361 = vld [vmem:[%s355 + $0x10] sm:$0xf]
                  %362 = vst [vmem:[%s356 + $0x8] sm:$0xf] %v361
                  %v363 = vld [vmem:[%s355 + $0x18] sm:$0xf]
                  %364 = vst [vmem:[%s356 + $0xc] sm:$0xf] %v363
                  %v365 = vld [vmem:[%s355 + $0x20] sm:$0xf]
                  %366 = vst [vmem:[%s356 + $0x10] sm:$0xf] %v365
                  %v367 = vld [vmem:[%s355 + $0x28] sm:$0xf]
                  %368 = vst [vmem:[%s356 + $0x14] sm:$0xf] %v367
                  %v369 = vld [vmem:[%s355 + $0x30] sm:$0xf]
                  %370 = vst [vmem:[%s356 + $0x18] sm:$0xf] %v369
                  %v371 = vld [vmem:[%s355 + $0x38] sm:$0xf]
                  %372 = vst [vmem:[%s356 + $0x1c] sm:$0xf] %v371
                  %v373 = vld [vmem:[%s355 + $0x40] sm:$0xf]
                  %374 = vst [vmem:[%s356 + $0x20] sm:$0xf] %v373
                  %v375 = vld [vmem:[%s355 + $0x48] sm:$0xf]
                  %376 = vst [vmem:[%s356 + $0x24] sm:$0xf] %v375
                  %v377 = vld [vmem:[%s355 + $0x50] sm:$0xf]
                  %378 = vst [vmem:[%s356 + $0x28] sm:$0xf] %v377
                  %v379 = vld [vmem:[%s355 + $0x58] sm:$0xf]
                  %380 = vst [vmem:[%s356 + $0x2c] sm:$0xf] %v379
                  %v381 = vld [vmem:[%s355 + $0x60] sm:$0xf]
                  %382 = vst [vmem:[%s356 + $0x30] sm:$0xf] %v381
                  %v383 = vld [vmem:[%s355 + $0x68] sm:$0xf]
                  %384 = vst [vmem:[%s356 + $0x34] sm:$0xf] %v383
                  %v385 = vld [vmem:[%s355 + $0x70] sm:$0xf]
                  %386 = vst [vmem:[%s356 + $0x38] sm:$0xf] %v385
                  %v387 = vld [vmem:[%s355 + $0x78] sm:$0xf]
                  %388 = vst [vmem:[%s356 + $0x3c] sm:$0xf] %v387
                $region96: #{base_block_forward.1} parent=83 // loop_footer
                  %s354 = sadd.s32 1, %s350
                $region97: #{base_block_forward.1} parent=83 // loop_footer_branch
                  %349 = sbr.rel target = $region93
                $region98: #{base_block_forward.1} parent=83 // loop_exit
                  _
              $region84: #{base_block_forward.1} parent=68 // pred_fallthru
                _
            $region69: #{base_block_forward.1} parent=64 // pred_fallthru
              _
            // Predicated region
            $region70: #{base_block_forward.1} parent=64 // pred_check
              _
            $region71: #{base_block_forward.1} parent=64 // pred_check_branch
              %296 = sbr.rel (0) target = $region73
            $region72: #{base_block_forward.1} parent=64 // pred_region
              loop: start=0, step=1, limit=1
              $region74: #{base_block_forward.1} parent=72 // loop_pre_header
                _
              $region75: #{base_block_forward.1} parent=72 // loop_header
                %s299 = sphi 0, %s303
                %p300 = scmp.ge.s32.totalorder %s299, 1
                %s304 = sphi %s290, %s290
                %s305 = sphi %s285, %s285
              $region76: #{base_block_forward.1} parent=72 // loop_header_branch
                %302 = sbr.rel (%p300) target = $region80
              $region77: #{base_block_forward.1} parent=72 // loop_body
                %v306 = vld [vmem:[%s304] sm:$0xf]
                %307 = vst [vmem:[%s305] sm:$0xf] %v306
                %v308 = vld [vmem:[%s304 + $0x8] sm:$0xf]
                %309 = vst [vmem:[%s305 + $0x4] sm:$0xf] %v308
                %v310 = vld [vmem:[%s304 + $0x10] sm:$0xf]
                %311 = vst [vmem:[%s305 + $0x8] sm:$0xf] %v310
                %v312 = vld [vmem:[%s304 + $0x18] sm:$0xf]
                %313 = vst [vmem:[%s305 + $0xc] sm:$0xf] %v312
                %v314 = vld [vmem:[%s304 + $0x20] sm:$0xf]
                %315 = vst [vmem:[%s305 + $0x10] sm:$0xf] %v314
                %v316 = vld [vmem:[%s304 + $0x28] sm:$0xf]
                %317 = vst [vmem:[%s305 + $0x14] sm:$0xf] %v316
                %v318 = vld [vmem:[%s304 + $0x30] sm:$0xf]
                %319 = vst [vmem:[%s305 + $0x18] sm:$0xf] %v318
                %v320 = vld [vmem:[%s304 + $0x38] sm:$0xf]
                %321 = vst [vmem:[%s305 + $0x1c] sm:$0xf] %v320
                %v322 = vld [vmem:[%s304 + $0x40] sm:$0xf]
                %323 = vst [vmem:[%s305 + $0x20] sm:$0xf] %v322
                %v324 = vld [vmem:[%s304 + $0x48] sm:$0xf]
                %325 = vst [vmem:[%s305 + $0x24] sm:$0xf] %v324
                %v326 = vld [vmem:[%s304 + $0x50] sm:$0xf]
                %327 = vst [vmem:[%s305 + $0x28] sm:$0xf] %v326
                %v328 = vld [vmem:[%s304 + $0x58] sm:$0xf]
                %329 = vst [vmem:[%s305 + $0x2c] sm:$0xf] %v328
                %v330 = vld [vmem:[%s304 + $0x60] sm:$0xf]
                %331 = vst [vmem:[%s305 + $0x30] sm:$0xf] %v330
                %v332 = vld [vmem:[%s304 + $0x68] sm:$0xf]
                %333 = vst [vmem:[%s305 + $0x34] sm:$0xf] %v332
                %v334 = vld [vmem:[%s304 + $0x70] sm:$0xf]
                %335 = vst [vmem:[%s305 + $0x38] sm:$0xf] %v334
                %v336 = vld [vmem:[%s304 + $0x78] sm:$0xf]
                %337 = vst [vmem:[%s305 + $0x3c] sm:$0xf] %v336
              $region78: #{base_block_forward.1} parent=72 // loop_footer
                %s303 = sadd.s32 1, %s299
              $region79: #{base_block_forward.1} parent=72 // loop_footer_branch
                %298 = sbr.rel target = $region75
              $region80: #{base_block_forward.1} parent=72 // loop_exit
                _
            $region73: #{base_block_forward.1} parent=64 // pred_fallthru
              _
          $region65: #{base_block_forward.1} parent=60 // pred_fallthru
            _
          %389 = vnop
        $region61: #{base_block_forward.1} parent=15 // pred_fallthru
          _
        // Predicated region
        $region99: #{base_block_forward.1} parent=15 // pred_check
          %p390 = pneg %p100
        $region100: #{base_block_forward.1} parent=15 // pred_check_branch
          %392 = sbr.rel (%p390) target = $region102
        $region101: #{base_block_forward.1} parent=15 // pred_region
          %p393 = scmp.lt.s32.totalorder %s21, 1
          %s394 = scalar_select %p393, %s21, 1
          %s395 = scalar_lea.vmem %s2, %s394
        $region102: #{base_block_forward.1} parent=15 // pred_fallthru
          _
        // Predicated region
        $region103: #{base_block_forward.1} parent=15 // pred_check
          %p396 = pneg %p126
        $region104: #{base_block_forward.1} parent=15 // pred_check_branch
          %398 = sbr.rel (%p396) target = $region106
        $region105: #{base_block_forward.1} parent=15 // pred_region
          %p399 = scmp.lt.s32.totalorder %s21, 1
          %s400 = scalar_select %p399, %s21, 1
          %s401 = scalar_lea.vmem %s3, %s400
        $region106: #{base_block_forward.1} parent=15 // pred_fallthru
          _
        // Predicated region
        $region107: #{base_block_forward.1} parent=15 // pred_check
          %p402 = pneg %p152
        $region108: #{base_block_forward.1} parent=15 // pred_check_branch
          %404 = sbr.rel (%p402) target = $region110
        $region109: #{base_block_forward.1} parent=15 // pred_region
          %p405 = scmp.lt.s32.totalorder %s21, 1
          %s406 = scalar_select %p405, %s21, 1
          %s407 = scalar_lea.vmem %s4, %s406
        $region110: #{base_block_forward.1} parent=15 // pred_fallthru
          _
      $region16: #{base_block_forward.1} parent=5 // pred_fallthru
        _
      %p408 = scmp.le.s32.totalorder 1, %s14
      %p409 = scmp.lt.s32.totalorder %s14, 5
      %p410 = pnand %p408, %p409
      %p411 = pneg %p410
      // Predicated region
      $region111: #{base_block_forward.1} parent=5 // pred_check
        _
      $region112: #{base_block_forward.1} parent=5 // pred_check_branch
        %413 = sbr.rel (%p410) target = $region114
      $region113: #{base_block_forward.1} parent=5 // pred_region
        %s414 = ssub.s32 %s14, 1
        %s415 = sand.u32 %s39, 1
        %s416 = sand.u32 %s39, 1
        %s417 = smul.addr %s416, 32
        %s418 = scalar_lea.vmem [#allocation3], %s417
        // Predicated region
        $region115: #{base_block_forward.1} parent=113 // pred_check
          %p419 = pneg %p52
        $region116: #{base_block_forward.1} parent=113 // pred_check_branch
          %421 = sbr.rel (%p419) target = $region118
        $region117: #{base_block_forward.1} parent=113 // pred_region
          _
        $region118: #{base_block_forward.1} parent=113 // pred_fallthru
          _
        %s422 = sand.u32 %s67, 1
        %s423 = sand.u32 %s67, 1
        %s424 = smul.addr %s423, 64
        %s425 = scalar_lea.vmem [#allocation4], %s424
        // Predicated region
        $region119: #{base_block_forward.1} parent=113 // pred_check
          %p426 = pneg %p80
        $region120: #{base_block_forward.1} parent=113 // pred_check_branch
          %428 = sbr.rel (%p426) target = $region122
        $region121: #{base_block_forward.1} parent=113 // pred_region
          _
        $region122: #{base_block_forward.1} parent=113 // pred_fallthru
          _
        %s429 = sand.u32 %s39, 1
        %s430 = sand.u32 %s39, 1
        %s431 = smul.addr %s430, 32
        %s432 = scalar_lea.vmem [#allocation3], %s431
        %p433 = pneg %p52
        %p434 = pneg %p49
        %s435 = sand.u32 %s67, 1
        %s436 = sand.u32 %s67, 1
        %s437 = smul.addr %s436, 64
        %s438 = scalar_lea.vmem [#allocation4], %s437
        %p439 = pneg %p80
        %p440 = pneg %p77
        %p441 = scmp.lt.s32.totalorder %s23, 1
        %s442 = scalar_select %p441, %s23, 1
        %s443 = scalar_lea.vmem %s2, %s442
        %p444 = pneg %p106
        %p445 = pneg %p103
        %p446 = scmp.lt.s32.totalorder %s23, 1
        %s447 = scalar_select %p446, %s23, 1
        %s448 = scalar_lea.vmem %s3, %s447
        %p449 = pneg %p132
        %p450 = pneg %p129
        %p451 = scmp.lt.s32.totalorder %s23, 1
        %s452 = scalar_select %p451, %s23, 1
        %s453 = scalar_lea.vmem %s4, %s452
        %p454 = pneg %p158
        %p455 = pneg %p155
        %p456 = pneg %p184
        %p457 = pneg %p181
        %s458 = sand.u32 %s171, 1
        %s459 = scalar_lea.sflag [#allocation6], %s458
        %s460 = sand.u32 %s171, 1
        %s461 = smul.addr %s460, 64
        %s462 = scalar_lea.vmem [#allocation5], %s461
        %s463 = smul.u32 16, %s24
        %p464 = scmp.lt.s32.totalorder %s23, 1
        %s465 = scalar_select %p464, %s23, 1
        %s466 = scalar_lea.vmem %s2, %s465
        %p467 = scmp.lt.s32.totalorder %s23, 1
        %s468 = scalar_select %p467, %s23, 1
        %s469 = scalar_lea.vmem %s3, %s468
        %p470 = scmp.lt.s32.totalorder %s23, 1
        %s471 = scalar_select %p470, %s23, 1
        %s472 = scalar_lea.vmem %s4, %s471
        %p474 = scmp.eq.s32.totalorder %s24, 0
        // Predicated region
        $region123: #{base_block_forward.1} parent=113 // pred_check
          %p475 = pneg %p474
        $region124: #{base_block_forward.1} parent=113 // pred_check_branch
          %477 = sbr.rel (%p475) target = $region126
        $region125: #{base_block_forward.1} parent=113 // pred_region
          %478 = vst [vmem:[#allocation2] sm:$0xff] 0.0
          %479 = vst [vmem:[#allocation2 + $0x8] sm:$0xff] 0.0
          %480 = vst [vmem:[#allocation2 + $0x10] sm:$0xff] 0.0
          %481 = vst [vmem:[#allocation2 + $0x18] sm:$0xff] 0.0
          %482 = vst [vmem:[#allocation2 + $0x20] sm:$0xff] 0.0
          %483 = vst [vmem:[#allocation2 + $0x28] sm:$0xff] 0.0
          %484 = vst [vmem:[#allocation2 + $0x30] sm:$0xff] 0.0
          %485 = vst [vmem:[#allocation2 + $0x38] sm:$0xff] 0.0
        $region126: #{base_block_forward.1} parent=113 // pred_fallthru
          _
        %v486 = vld [vmem:[#allocation2] sm:$0xff]
        %v487 = vld [vmem:[#allocation2 + $0x8] sm:$0xff]
        %v488 = vld [vmem:[#allocation2 + $0x10] sm:$0xff]
        %v489 = vld [vmem:[#allocation2 + $0x18] sm:$0xff]
        %v490 = vld [vmem:[#allocation2 + $0x20] sm:$0xff]
        %v491 = vld [vmem:[#allocation2 + $0x28] sm:$0xff]
        %v492 = vld [vmem:[#allocation2 + $0x30] sm:$0xff]
        %v493 = vld [vmem:[#allocation2 + $0x38] sm:$0xff]
        %v494 = vld [vmem:[%s418] sm:$0xf]
        %v495 = vld [vmem:[%s418 + $0x4] sm:$0xf]
        %v496 = vld [vmem:[%s418 + $0x8] sm:$0xf]
        %v497 = vld [vmem:[%s418 + $0xc] sm:$0xf]
        %v498 = vld [vmem:[%s418 + $0x10] sm:$0xf]
        %v499 = vld [vmem:[%s418 + $0x14] sm:$0xf]
        %v500 = vld [vmem:[%s418 + $0x18] sm:$0xf]
        %v501 = vld [vmem:[%s418 + $0x1c] sm:$0xf]
        %v502 = vld [vmem:[%s425] sm:$0xf]
        %v503 = vld [vmem:[%s425 + $0x4] sm:$0xf]
        %v504 = vld [vmem:[%s425 + $0x8] sm:$0xf]
        %v505 = vld [vmem:[%s425 + $0xc] sm:$0xf]
        %v506 = vld [vmem:[%s425 + $0x10] sm:$0xf]
        %v507 = vld [vmem:[%s425 + $0x14] sm:$0xf]
        %v508 = vld [vmem:[%s425 + $0x18] sm:$0xf]
        %v509 = vld [vmem:[%s425 + $0x1c] sm:$0xf]
        %v510 = vld [vmem:[%s425 + $0x20] sm:$0xf]
        %v511 = vld [vmem:[%s425 + $0x24] sm:$0xf]
        %v512 = vld [vmem:[%s425 + $0x28] sm:$0xf]
        %v513 = vld [vmem:[%s425 + $0x2c] sm:$0xf]
        %v514 = vld [vmem:[%s425 + $0x30] sm:$0xf]
        %v515 = vld [vmem:[%s425 + $0x34] sm:$0xf]
        %v516 = vld [vmem:[%s425 + $0x38] sm:$0xf]
        %v517 = vld [vmem:[%s425 + $0x3c] sm:$0xf]
        %v526 = vunpack.c.l.b16 %v494
        %v527 = vunpack.c.l.b16 %v495
        %v528 = vunpack.c.l.b16 %v496
        %v529 = vunpack.c.l.b16 %v497
        %v530 = vunpack.c.l.b16 %v498
        %v531 = vunpack.c.l.b16 %v499
        %v532 = vunpack.c.l.b16 %v500
        %v533 = vunpack.c.l.b16 %v501
        %v534 = vpack.c.b16 %v527, %v526
        %v535 = vpack.c.b16 %v529, %v528
        %v536 = vpack.c.b16 %v531, %v530
        %v537 = vpack.c.b16 %v533, %v532
        %v558 = vunpack.c.l.b16 %v502
        %v559 = vunpack.c.l.b16 %v503
        %v560 = vunpack.c.l.b16 %v504
        %v561 = vunpack.c.l.b16 %v505
        %v562 = vunpack.c.l.b16 %v506
        %v563 = vunpack.c.l.b16 %v507
        %v564 = vunpack.c.l.b16 %v508
        %v565 = vunpack.c.l.b16 %v509
        %v566 = vunpack.c.l.b16 %v510
        %v567 = vunpack.c.l.b16 %v511
        %v568 = vunpack.c.l.b16 %v512
        %v569 = vunpack.c.l.b16 %v513
        %v570 = vunpack.c.l.b16 %v514
        %v571 = vunpack.c.l.b16 %v515
        %v572 = vunpack.c.l.b16 %v516
        %v573 = vunpack.c.l.b16 %v517
        %v574 = vpack.c.b16 %v559, %v558
        %v575 = vpack.c.b16 %v561, %v560
        %v576 = vpack.c.b16 %v563, %v562
        %v577 = vpack.c.b16 %v565, %v564
        %v578 = vpack.c.b16 %v567, %v566
        %v579 = vpack.c.b16 %v569, %v568
        %v580 = vpack.c.b16 %v571, %v570
        %v581 = vpack.c.b16 %v573, %v572
        %590 = vmatprep.subr.bf16.mxu0 0
        %591 = vmatpush1.bf16.msra.mxu0 %v574
        %592 = vmatprep.subr.bf16.mxu0 0
        %593 = vmatpush1.bf16.msra.mxu0 %v575
        %594 = vmatprep.subr.bf16.mxu0 0
        %595 = vmatpush1.bf16.msra.mxu0 %v576
        %596 = vmatprep.subr.bf16.mxu0 0
        %597 = vmatpush1.bf16.msra.mxu0 %v577
        %598 = vmatprep.subr.bf16.mxu0 0
        %599 = vmatpush1.bf16.msra.mxu0 %v578
        %600 = vmatprep.subr.bf16.mxu0 0
        %601 = vmatpush1.bf16.msra.mxu0 %v579
        %602 = vmatprep.subr.bf16.mxu0 0
        %603 = vmatpush1.bf16.msra.mxu0 %v580
        %604 = vmatprep.subr.bf16.mxu0 0
        %605 = vmatpush1.bf16.msra.mxu0 %v581
        %606 = vmatprep.subr.bf16.mxu0 0
        %607 = vmatpush1.bf16.msra.mxu0 0
        %608 = vmatprep.subr.bf16.mxu0 0
        %609 = vmatpush1.bf16.msra.mxu0 0
        %610 = vmatprep.subr.bf16.mxu0 0
        %611 = vmatpush1.bf16.msra.mxu0 0
        %612 = vmatprep.subr.bf16.mxu0 0
        %613 = vmatpush1.bf16.msra.mxu0 0
        %614 = vmatprep.subr.bf16.mxu0 0
        %615 = vmatpush1.bf16.msra.mxu0 0
        %616 = vmatprep.subr.bf16.mxu0 0
        %617 = vmatpush1.bf16.msra.mxu0 0
        %618 = vmatprep.subr.bf16.mxu0 0
        %619 = vmatpush1.bf16.msra.mxu0 0
        %620 = vmatprep.subr.bf16.mxu0 0
        %621 = vmatpush1.bf16.msra.mxu0 0
        %622 = vmatprep.mubr.bf16.mxu0 0
        %623 = vmatmul.mubr.bf16.gmra.mrb[0].mxu0 %v534
        %v624 = vpop.f32.mrb[0].mxu0
        %v625 = vadd.f32 0.0, %v624
        %v626 = vpop.f32.mrb[0].mxu0
        %v627 = vpop.f32.mrb[0].mxu0
        %v628 = vadd.f32 0.0, %v627
        %v629 = vpop.f32.mrb[0].mxu0
        %630 = vmatprep.mubr.bf16.mxu0 0
        %631 = vmatmul.mubr.bf16.gmra.mrb[0].mxu0 %v535
        %v632 = vpop.f32.mrb[0].mxu0
        %v633 = vadd.f32 0.0, %v632
        %v634 = vpop.f32.mrb[0].mxu0
        %v635 = vpop.f32.mrb[0].mxu0
        %v636 = vadd.f32 0.0, %v635
        %v637 = vpop.f32.mrb[0].mxu0
        %638 = vmatprep.mubr.bf16.mxu0 0
        %639 = vmatmul.mubr.bf16.gmra.mrb[0].mxu0 %v536
        %v640 = vpop.f32.mrb[0].mxu0
        %v641 = vadd.f32 0.0, %v640
        %v642 = vpop.f32.mrb[0].mxu0
        %v643 = vpop.f32.mrb[0].mxu0
        %v644 = vadd.f32 0.0, %v643
        %v645 = vpop.f32.mrb[0].mxu0
        %646 = vmatprep.mubr.bf16.mxu0 0
        %647 = vmatmul.mubr.bf16.gmra.mrb[0].mxu0 %v537
        %v648 = vpop.f32.mrb[0].mxu0
        %v649 = vadd.f32 0.0, %v648
        %v650 = vpop.f32.mrb[0].mxu0
        %v651 = vpop.f32.mrb[0].mxu0
        %v652 = vadd.f32 0.0, %v651
        %v653 = vpop.f32.mrb[0].mxu0
        %654 = vdwg.mxu0
        %v655 = vadd.f32 %v486, %v625
        %v656 = vadd.f32 %v487, %v628
        %v657 = vadd.f32 %v488, %v633
        %v658 = vadd.f32 %v489, %v636
        %v659 = vadd.f32 %v490, %v641
        %v660 = vadd.f32 %v491, %v644
        %v661 = vadd.f32 %v492, %v649
        %v662 = vadd.f32 %v493, %v652
        %663 = vst [vmem:[#allocation2] sm:$0xff] %v655
        %664 = vst [vmem:[#allocation2 + $0x8] sm:$0xff] %v656
        %665 = vst [vmem:[#allocation2 + $0x10] sm:$0xff] %v657
        %666 = vst [vmem:[#allocation2 + $0x18] sm:$0xff] %v658
        %667 = vst [vmem:[#allocation2 + $0x20] sm:$0xff] %v659
        %668 = vst [vmem:[#allocation2 + $0x28] sm:$0xff] %v660
        %669 = vst [vmem:[#allocation2 + $0x30] sm:$0xff] %v661
        %670 = vst [vmem:[#allocation2 + $0x38] sm:$0xff] %v662
        %p671 = scmp.eq.s32.totalorder %s24, 1
        // Predicated region
        $region127: #{base_block_forward.1} parent=113 // pred_check
          %p672 = pneg %p671
        $region128: #{base_block_forward.1} parent=113 // pred_check_branch
          %674 = sbr.rel (%p672) target = $region130
        $region129: #{base_block_forward.1} parent=113 // pred_region
          %v675 = vld [vmem:[#allocation2] sm:$0xff]
          %v676 = vld [vmem:[#allocation2 + $0x8] sm:$0xff]
          %v677 = vld [vmem:[#allocation2 + $0x10] sm:$0xff]
          %v678 = vld [vmem:[#allocation2 + $0x18] sm:$0xff]
          %v679 = vld [vmem:[#allocation2 + $0x20] sm:$0xff]
          %v680 = vld [vmem:[#allocation2 + $0x28] sm:$0xff]
          %v681 = vld [vmem:[#allocation2 + $0x30] sm:$0xff]
          %v682 = vld [vmem:[#allocation2 + $0x38] sm:$0xff]
          %v683 = vld [vmem:[%s466] sm:$0x1]
          %v685 = vlaneseq
          %v686 = vshrl.u32 %v685, 7
          %v687 = vsub.s32 0, %v686
          %v688 = vrot.slane %v683, %v687
          %v690 = vadd.f32 %v675, %v688
          %v691 = vadd.f32 %v676, %v688
          %v692 = vadd.f32 %v677, %v688
          %v693 = vadd.f32 %v678, %v688
          %v694 = vadd.f32 %v679, %v688
          %v695 = vadd.f32 %v680, %v688
          %v696 = vadd.f32 %v681, %v688
          %v697 = vadd.f32 %v682, %v688
          %v698 = vmax.f32 %v690, 0.0
          %v699 = vmax.f32 %v691, 0.0
          %v700 = vmax.f32 %v692, 0.0
          %v701 = vmax.f32 %v693, 0.0
          %v702 = vmax.f32 %v694, 0.0
          %v703 = vmax.f32 %v695, 0.0
          %v704 = vmax.f32 %v696, 0.0
          %v705 = vmax.f32 %v697, 0.0
          %v706 = vadd.f32 %v698, %v699
          %v707 = vadd.f32 %v706, %v700
          %v708 = vadd.f32 %v707, %v701
          %v709 = vadd.f32 %v708, %v702
          %v710 = vadd.f32 %v709, %v703
          %v711 = vadd.f32 %v710, %v704
          %v712 = vadd.f32 %v711, %v705
          %v713 = vrot.slane %v712, 4
          %v714 = vadd.f32 %v712, %v713
          %v715 = vrot.slane %v714, 2
          %v716 = vadd.f32 %v714, %v715
          %v717 = vrot.slane %v716, 1
          %v718 = vadd.f32 %v716, %v717
          %v719 = vmul.f32 %v698, %v698
          %v720 = vmul.f32 %v699, %v699
          %v721 = vmul.f32 %v700, %v700
          %v722 = vmul.f32 %v701, %v701
          %v723 = vmul.f32 %v702, %v702
          %v724 = vmul.f32 %v703, %v703
          %v725 = vmul.f32 %v704, %v704
          %v726 = vmul.f32 %v705, %v705
          %v727 = vadd.f32 %v719, %v720
          %v728 = vadd.f32 %v727, %v721
          %v729 = vadd.f32 %v728, %v722
          %v730 = vadd.f32 %v729, %v723
          %v731 = vadd.f32 %v730, %v724
          %v732 = vadd.f32 %v731, %v725
          %v733 = vadd.f32 %v732, %v726
          %v734 = vrot.slane %v733, 4
          %v735 = vadd.f32 %v733, %v734
          %v736 = vrot.slane %v735, 2
          %v737 = vadd.f32 %v735, %v736
          %v738 = vrot.slane %v737, 1
          %v739 = vadd.f32 %v737, %v738
          %v740 = vmul.f32 %v718, 0.015625
          %v741 = vmul.f32 %v739, 0.015625
          %v742 = vmul.f32 %v740, %v740
          %v743 = vsub.f32 %v741, %v742
          %v744 = vmax.f32 %v743, 0.0
          %v745 = vsub.f32 %v698, %v740
          %v746 = vsub.f32 %v699, %v740
          %v747 = vsub.f32 %v700, %v740
          %v748 = vsub.f32 %v701, %v740
          %v749 = vsub.f32 %v702, %v740
          %v750 = vsub.f32 %v703, %v740
          %v751 = vsub.f32 %v704, %v740
          %v752 = vsub.f32 %v705, %v740
          %v753 = vadd.f32 %v744, 1e-05
          %v754 = vrsqrt.pop %v753
          %v755 = vmul.f32 %v745, %v754
          %v756 = vmul.f32 %v746, %v754
          %v757 = vmul.f32 %v747, %v754
          %v758 = vmul.f32 %v748, %v754
          %v759 = vmul.f32 %v749, %v754
          %v760 = vmul.f32 %v750, %v754
          %v761 = vmul.f32 %v751, %v754
          %v762 = vmul.f32 %v752, %v754
          %v763 = vld [vmem:[%s469] sm:$0x1]
          %v765 = vlaneseq
          %v766 = vshrl.u32 %v765, 7
          %v767 = vsub.s32 0, %v766
          %v768 = vrot.slane %v763, %v767
          %v770 = vmul.f32 %v768, %v755
          %v771 = vmul.f32 %v768, %v756
          %v772 = vmul.f32 %v768, %v757
          %v773 = vmul.f32 %v768, %v758
          %v774 = vmul.f32 %v768, %v759
          %v775 = vmul.f32 %v768, %v760
          %v776 = vmul.f32 %v768, %v761
          %v777 = vmul.f32 %v768, %v762
          %v778 = vld [vmem:[%s472] sm:$0x1]
          %v780 = vlaneseq
          %v781 = vshrl.u32 %v780, 7
          %v782 = vsub.s32 0, %v781
          %v783 = vrot.slane %v778, %v782
          %v785 = vadd.f32 %v770, %v783
          %v786 = vadd.f32 %v771, %v783
          %v787 = vadd.f32 %v772, %v783
          %v788 = vadd.f32 %v773, %v783
          %v789 = vadd.f32 %v774, %v783
          %v790 = vadd.f32 %v775, %v783
          %v791 = vadd.f32 %v776, %v783
          %v792 = vadd.f32 %v777, %v783
          %793 = vst [vmem:[%s462] sm:$0xff] %v785
          %794 = vst [vmem:[%s462 + $0x8] sm:$0xff] %v786
          %795 = vst [vmem:[%s462 + $0x10] sm:$0xff] %v787
          %796 = vst [vmem:[%s462 + $0x18] sm:$0xff] %v788
          %797 = vst [vmem:[%s462 + $0x20] sm:$0xff] %v789
          %798 = vst [vmem:[%s462 + $0x28] sm:$0xff] %v790
          %799 = vst [vmem:[%s462 + $0x30] sm:$0xff] %v791
          %800 = vst [vmem:[%s462 + $0x38] sm:$0xff] %v792
        $region130: #{base_block_forward.1} parent=113 // pred_fallthru
          _
        %s801 = sand.u32 %s171, 1
        %s802 = scalar_lea.sflag [#allocation6], %s801
        %s803 = sand.u32 %s171, 1
        %s804 = smul.addr %s803, 64
        %s805 = scalar_lea.vmem [#allocation5], %s804
        // Predicated region
        $region131: #{base_block_forward.1} parent=113 // pred_check
          %p806 = pneg %p181
        $region132: #{base_block_forward.1} parent=113 // pred_check_branch
          %808 = sbr.rel (%p806) target = $region134
        $region133: #{base_block_forward.1} parent=113 // pred_region
          %s810 = ssub.s32 1024, 1024
          %811 = vsyncadd %s802, %s810
          %s812 = smul.addr %s23, 128
          %s813 = scalar_lea.hbm %s5, %s812
          %s814 = sshll.u32 %s805, 4
          %s815 = int_to_ptr.vmem [resolvable:$true] %s814
          %820 = dma.vmem_to_hbm [thread:$0]  %s815, 1024, %s813, %s802, 128, 256, 8
        $region134: #{base_block_forward.1} parent=113 // pred_fallthru
          _
      $region114: #{base_block_forward.1} parent=5 // pred_fallthru
        _
      %p821 = scmp.le.s32.totalorder 2, %s14
      // Predicated region
      $region135: #{base_block_forward.1} parent=5 // pred_check
        %p822 = pneg %p821
      $region136: #{base_block_forward.1} parent=5 // pred_check_branch
        %824 = sbr.rel (%p822) target = $region138
      $region137: #{base_block_forward.1} parent=5 // pred_region
        %s825 = ssub.s32 %s14, 2
        // Predicated region
        $region139: #{base_block_forward.1} parent=137 // pred_check
          %p826 = pneg %p187
        $region140: #{base_block_forward.1} parent=137 // pred_check_branch
          %828 = sbr.rel (%p826) target = $region142
        $region141: #{base_block_forward.1} parent=137 // pred_region
          %s829 = sand.u32 %s172, 1
          %s830 = scalar_lea.sflag [#allocation6], %s829
          %s831 = sand.u32 %s172, 1
          %s832 = smul.addr %s831, 64
          %s833 = scalar_lea.vmem [#allocation5], %s832
          %834 = dma.done %s830, 1024
        $region142: #{base_block_forward.1} parent=137 // pred_fallthru
          _
      $region138: #{base_block_forward.1} parent=5 // pred_fallthru
        _
    $region6: #{base_block_forward.1} parent=1 // loop_footer
      %s18 = sadd.s32 1, %s14
    $region7: #{base_block_forward.1} parent=1 // loop_footer_branch
      %13 = sbr.rel target = $region3
    $region8: #{base_block_forward.1} parent=1 // loop_exit
      _
    %835 = vsyncpa [#allocation6], 1
    %s836 = scalar_lea.sflag [#allocation6], 1
    %837 = vsyncpa %s836, 1

</llo_original>
